<compile_context>
chip_gen: v7x
topology: tpu7x:2x2x1
jax: 0.10.0
libtpu: 0.0.40
codegen_flags: <defaults>
</compile_context>

<pallas_src>
import jax
import jax.numpy as jnp
from jax.experimental import pallas as pl
from jax.experimental.pallas import tpu as pltpu

BN_EPS = 1e-5


# ---------------------------------------------------------------------------
# Pallas kernel (built per (num_features, num_layers) configuration)
# ---------------------------------------------------------------------------
def _make_fuse_kernel(num_feats, num_layers, compute_dtype):
    def kernel(*refs):
        xs = refs[:num_feats]                                   # (1, C_i, TL) each
        w1s = refs[num_feats:2 * num_feats]                     # (C1, C_i) each
        ws = refs[2 * num_feats:2 * num_feats + num_layers - 1]  # (C_{j+1}, C_j)
        bs = refs[2 * num_feats + num_layers - 1:
                  2 * num_feats + 2 * num_layers - 1]           # (C_j, 1)
        out_ref = refs[-1]                                      # (1, C_out, TL)

        # Layer 1: the channel concat is folded into per-feature partial matmuls.
        acc = None
        for xr, wr in zip(xs, w1s):
            x = xr[0].astype(compute_dtype)                     # (C_i, TL)
            w = wr[...].astype(compute_dtype)                   # (C1, C_i)
            p = jnp.dot(w, x, preferred_element_type=jnp.float32)
            acc = p if acc is None else acc + p
        h = jnp.maximum(acc + bs[0][...], 0.0)                  # folded-BN bias + ReLU

        # Remaining pointwise-conv layers.
        for j in range(1, num_layers):
            w = ws[j - 1][...].astype(compute_dtype)
            h = jnp.dot(w, h.astype(compute_dtype),
                        preferred_element_type=jnp.float32)
            h = jnp.maximum(h + bs[j][...], 0.0)

        out_ref[0] = h.astype(out_ref.dtype)

    return kernel


# ---------------------------------------------------------------------------
# Wrapper
# ---------------------------------------------------------------------------
def _pick_tile(length, max_tl):
    """Largest 128-multiple divisor of `length` not exceeding max_tl (or full L)."""
    if length <= max_tl:
        return length
    tl = (max_tl // 128) * 128
    while tl >= 128:
        if length % tl == 0:
            return tl
        tl -= 128
    # TODO(synk): ragged L with no 128-multiple divisor falls back to one full-L tile.
    return length


def feature_fusion(feature_list, params, *, max_tl=1024,
                   compute_dtype=jnp.float32, out_dtype=None):
    """feature_list: list of (N, C_i, L) f32 arrays -> (N, C_out, L)."""
    n, _, length = feature_list[0].shape
    feat_channels = [f.shape[1] for f in feature_list]
    for f in feature_list:
        assert f.shape[0] == n and f.shape[2] == length

    w1_parts = params["w1_parts"]     # first layer weight, split per input feature
    ws = params["ws"]                 # layers 2..nl weights (BN scale folded)
    bs = params["bs"]                 # per-layer bias column vectors (C_j, 1)
    nf = len(feature_list)
    nl = len(bs)
    c_out = bs[-1].shape[0]
    out_dtype = out_dtype or feature_list[0].dtype

    tl = _pick_tile(length, max_tl)

    def feat_spec(ci):
        return pl.BlockSpec((1, ci, tl), lambda b, li: (b, 0, li))

    def const_spec(arr):
        return pl.BlockSpec(arr.shape, lambda b, li: (0, 0))

    in_specs = ([feat_spec(ci) for ci in feat_channels]
                + [const_spec(w) for w in w1_parts]
                + [const_spec(w) for w in ws]
                + [const_spec(b) for b in bs])

    kernel = _make_fuse_kernel(nf, nl, compute_dtype)

    return pl.pallas_call(
        kernel,
        out_shape=jax.ShapeDtypeStruct((n, c_out, length), out_dtype),
        grid_spec=pltpu.PrefetchScalarGridSpec(
            num_scalar_prefetch=0,
            grid=(n, length // tl),
            in_specs=in_specs,
            out_specs=pl.BlockSpec((1, c_out, tl), lambda b, li: (b, 0, li)),
        ),
        compiler_params=pltpu.CompilerParams(
            dimension_semantics=("parallel", "parallel")),
    )(*feature_list, *w1_parts, *ws, *bs)


# ---------------------------------------------------------------------------
# Deterministic parameter construction (synthetic, no checkpoint)
# ---------------------------------------------------------------------------
def make_params(key, feat_channels, fuse_filters, eps=BN_EPS):
    in_channels = sum(feat_channels)
    dims = [in_channels] + list(fuse_filters)
    nl = len(fuse_filters)
    keys = jax.random.split(key, 5 * nl)

    ref_layers = []
    folded_w = []
    folded_b = []
    for j in range(nl):
        cin, cout = dims[j], dims[j + 1]
        kw, kg, kb, km, kv = keys[5 * j:5 * j + 5]
        w_pt = 0.1 * jax.random.normal(kw, (cout, cin, 1), jnp.float32)   # Conv1d weight
        gamma = 1.0 + 0.1 * jax.random.uniform(kg, (cout,), jnp.float32)
        beta = 0.05 * jax.random.normal(kb, (cout,), jnp.float32)
        mean = 0.01 * jax.random.normal(km, (cout,), jnp.float32)
        var = 1.0 + 0.1 * jax.random.uniform(kv, (cout,), jnp.float32)
        ref_layers.append((w_pt, gamma, beta, mean, var))

        scale = gamma / jnp.sqrt(var + eps)
        folded_w.append(w_pt[:, :, 0] * scale[:, None])                   # (cout, cin)
        folded_b.append((beta - mean * scale)[:, None])                   # (cout, 1)

    # Split the first-layer weight along input channels: one slice per input feature,
    # so the host-side channel concat disappears entirely.
    offs = [0]
    for c in feat_channels:
        offs.append(offs[-1] + c)
    w1_parts = [folded_w[0][:, offs[i]:offs[i + 1]] for i in range(len(feat_channels))]

    params = dict(w1_parts=w1_parts, ws=folded_w[1:], bs=folded_b)
    return params, ref_layers


def reference_forward(feature_list, ref_layers, eps=BN_EPS):
    """Pure-JAX reference mirroring the PyTorch forward (BN in inference mode)."""
    x = jnp.concatenate(feature_list, axis=1)                    # (N, C_in, L)
    for w_pt, gamma, beta, mean, var in ref_layers:
        x = jnp.einsum("oc,ncl->nol", w_pt[:, :, 0], x)
        scale = gamma / jnp.sqrt(var + eps)
        bias = beta - mean * scale
        x = jnp.maximum(x * scale[None, :, None] + bias[None, :, None], 0.0)
    return x


if __name__ == "__main__":
    key = jax.random.PRNGKey(0)
    k1, k2, kp = jax.random.split(key, 3)

    N, L = 4, 256
    FEAT_CHANNELS = [64, 32]          # two input feature maps -> in_channels = 96
    FUSE_FILTERS = [128, 64]          # fuse_filters

    feats = [jax.random.normal(k, (N, c, L), jnp.float32)
             for k, c in zip([k1, k2], FEAT_CHANNELS)]
    params, ref_layers = make_params(kp, FEAT_CHANNELS, FUSE_FILTERS)

    expected = reference_forward(feats, ref_layers)

    # Exact-parity run (f32 matmul operands).
    out = feature_fusion(feats, params, compute_dtype=jnp.float32)
    out = jax.block_until_ready(out)
    assert out.shape == (N, FUSE_FILTERS[-1], L), out.shape
    assert jnp.allclose(out, expected, atol=1e-4, rtol=1e-4), (
        float(jnp.max(jnp.abs(out - expected))))

    # bf16-operand run (recommended on v6e/v7x; f32 accumulation, looser check).
    out_bf16 = feature_fusion(feats, params, compute_dtype=jnp.bfloat16)
    out_bf16 = jax.block_until_ready(out_bf16)
    assert out_bf16.shape == expected.shape
    norm_err = float(jnp.max(jnp.abs(out_bf16 - expected))
                     / (jnp.max(jnp.abs(expected)) + 1e-6))
    assert norm_err < 5e-2, norm_err

    print("KERNEL_OK")
</pallas_src>

<mosaic_0001>
module attributes {stable_mosaic.version = 11 : i64} {
  func.func @kernel(%arg0: i32, %arg1: i32, %arg2: memref<1x64x256xf32, #tpu.memory_space<vmem>>, %arg3: memref<1x32x256xf32, #tpu.memory_space<vmem>>, %arg4: memref<128x64xf32, #tpu.memory_space<vmem>>, %arg5: memref<128x32xf32, #tpu.memory_space<vmem>>, %arg6: memref<64x128xf32, #tpu.memory_space<vmem>>, %arg7: memref<128x1xf32, #tpu.memory_space<vmem>>, %arg8: memref<64x1xf32, #tpu.memory_space<vmem>>, %arg9: memref<1x64x256xf32, #tpu.memory_space<vmem>>) attributes {dimension_semantics = [#tpu.dimension_semantics<parallel>, #tpu.dimension_semantics<parallel>], iteration_bounds = array<i64: 4, 1>, scalar_prefetch = 0 : i64, scratch_operands = 0 : i64, tpu.core_type = #tpu.core_type<tc>, window_params = [{transform_indices = @transform_0, window_bounds = array<i64: 1, 64, 256>}, {transform_indices = @transform_1, window_bounds = array<i64: 1, 32, 256>}, {pipeline_mode = #tpu.pipeline_mode<synchronous>, transform_indices = @transform_2, window_bounds = array<i64: 128, 64>}, {pipeline_mode = #tpu.pipeline_mode<synchronous>, transform_indices = @transform_3, window_bounds = array<i64: 128, 32>}, {pipeline_mode = #tpu.pipeline_mode<synchronous>, transform_indices = @transform_4, window_bounds = array<i64: 64, 128>}, {pipeline_mode = #tpu.pipeline_mode<synchronous>, transform_indices = @transform_5, window_bounds = array<i64: 128, 1>}, {pipeline_mode = #tpu.pipeline_mode<synchronous>, transform_indices = @transform_6, window_bounds = array<i64: 64, 1>}, {transform_indices = @transform_7, window_bounds = array<i64: 1, 64, 256>}]} {
    %c0 = arith.constant 0 : index
    %c0_0 = arith.constant 0 : index
    %c0_1 = arith.constant 0 : index
    %0 = vector.load %arg2[%c0, %c0_0, %c0_1] : memref<1x64x256xf32, #tpu.memory_space<vmem>>, vector<1x64x256xf32>
    %1 = vector.shape_cast %0 : vector<1x64x256xf32> to vector<64x256xf32>
    %c0_2 = arith.constant 0 : index
    %c0_3 = arith.constant 0 : index
    %2 = vector.load %arg4[%c0_2, %c0_3] : memref<128x64xf32, #tpu.memory_space<vmem>>, vector<128x64xf32>
    %cst = arith.constant dense<0.000000e+00> : vector<128x256xf32>
    %3 = tpu.matmul %2, %1, %cst {dimension_numbers = #tpu.dot_dimension_numbers<[1], [0], [0], [1], [0, 0, 1, 1], [], []>} : vector<128x64xf32>, vector<64x256xf32>, vector<128x256xf32> -> vector<128x256xf32>
    %c0_4 = arith.constant 0 : index
    %c0_5 = arith.constant 0 : index
    %c0_6 = arith.constant 0 : index
    %4 = vector.load %arg3[%c0_4, %c0_5, %c0_6] : memref<1x32x256xf32, #tpu.memory_space<vmem>>, vector<1x32x256xf32>
    %5 = vector.shape_cast %4 : vector<1x32x256xf32> to vector<32x256xf32>
    %c0_7 = arith.constant 0 : index
    %c0_8 = arith.constant 0 : index
    %6 = vector.load %arg5[%c0_7, %c0_8] : memref<128x32xf32, #tpu.memory_space<vmem>>, vector<128x32xf32>
    %cst_9 = arith.constant dense<0.000000e+00> : vector<128x256xf32>
    %7 = tpu.matmul %6, %5, %cst_9 {dimension_numbers = #tpu.dot_dimension_numbers<[1], [0], [0], [1], [0, 0, 1, 1], [], []>} : vector<128x32xf32>, vector<32x256xf32>, vector<128x256xf32> -> vector<128x256xf32>
    %8 = arith.addf %3, %7 : vector<128x256xf32>
    %c0_10 = arith.constant 0 : index
    %c0_11 = arith.constant 0 : index
    %9 = vector.load %arg7[%c0_10, %c0_11] : memref<128x1xf32, #tpu.memory_space<vmem>>, vector<128x1xf32>
    %10 = vector.broadcast %9 : vector<128x1xf32> to vector<128x256xf32>
    %11 = arith.addf %8, %10 : vector<128x256xf32>
    %cst_12 = arith.constant 0.000000e+00 : f32
    %12 = vector.broadcast %cst_12 : f32 to vector<128x256xf32>
    %13 = arith.maximumf %11, %12 : vector<128x256xf32>
    %c0_13 = arith.constant 0 : index
    %c0_14 = arith.constant 0 : index
    %14 = vector.load %arg6[%c0_13, %c0_14] : memref<64x128xf32, #tpu.memory_space<vmem>>, vector<64x128xf32>
    %cst_15 = arith.constant dense<0.000000e+00> : vector<64x256xf32>
    %15 = tpu.matmul %14, %13, %cst_15 {dimension_numbers = #tpu.dot_dimension_numbers<[1], [0], [0], [1], [0, 0, 1, 1], [], []>} : vector<64x128xf32>, vector<128x256xf32>, vector<64x256xf32> -> vector<64x256xf32>
    %c0_16 = arith.constant 0 : index
    %c0_17 = arith.constant 0 : index
    %16 = vector.load %arg8[%c0_16, %c0_17] : memref<64x1xf32, #tpu.memory_space<vmem>>, vector<64x1xf32>
    %17 = vector.broadcast %16 : vector<64x1xf32> to vector<64x256xf32>
    %18 = arith.addf %15, %17 : vector<64x256xf32>
    %cst_18 = arith.constant 0.000000e+00 : f32
    %19 = vector.broadcast %cst_18 : f32 to vector<64x256xf32>
    %20 = arith.maximumf %18, %19 : vector<64x256xf32>
    %c0_19 = arith.constant 0 : index
    %c0_20 = arith.constant 0 : index
    %c0_21 = arith.constant 0 : index
    %21 = vector.load %arg9[%c0_19, %c0_20, %c0_21] : memref<1x64x256xf32, #tpu.memory_space<vmem>>, vector<1x64x256xf32>
    %22 = vector.shape_cast %21 : vector<1x64x256xf32> to vector<64x256xf32>
    %23 = vector.shape_cast %20 : vector<64x256xf32> to vector<1x64x256xf32>
    tpu.vector_store %arg9[%c0_19, %c0_20, %c0_21], %23 {strides = array<i32>} : memref<1x64x256xf32, #tpu.memory_space<vmem>>, vector<1x64x256xf32>,
    return
  }
  func.func @transform_0(%arg0: i32, %arg1: i32) -> (i32, i32, i32) {
    %c0_i32 = arith.constant 0 : i32
    %c0_i32_0 = arith.constant 0 : i32
    return %arg0, %c0_i32, %arg1 : i32, i32, i32
  }
  func.func @transform_1(%arg0: i32, %arg1: i32) -> (i32, i32, i32) {
    %c0_i32 = arith.constant 0 : i32
    %c0_i32_0 = arith.constant 0 : i32
    return %arg0, %c0_i32, %arg1 : i32, i32, i32
  }
  func.func @transform_2(%arg0: i32, %arg1: i32) -> (i32, i32) {
    %c0_i32 = arith.constant 0 : i32
    %c0_i32_0 = arith.constant 0 : i32
    %c0_i32_1 = arith.constant 0 : i32
    return %c0_i32, %c0_i32_0 : i32, i32
  }
  func.func @transform_3(%arg0: i32, %arg1: i32) -> (i32, i32) {
    %c0_i32 = arith.constant 0 : i32
    %c0_i32_0 = arith.constant 0 : i32
    %c0_i32_1 = arith.constant 0 : i32
    return %c0_i32, %c0_i32_0 : i32, i32
  }
  func.func @transform_4(%arg0: i32, %arg1: i32) -> (i32, i32) {
    %c0_i32 = arith.constant 0 : i32
    %c0_i32_0 = arith.constant 0 : i32
    %c0_i32_1 = arith.constant 0 : i32
    return %c0_i32, %c0_i32_0 : i32, i32
  }
  func.func @transform_5(%arg0: i32, %arg1: i32) -> (i32, i32) {
    %c0_i32 = arith.constant 0 : i32
    %c0_i32_0 = arith.constant 0 : i32
    %c0_i32_1 = arith.constant 0 : i32
    return %c0_i32, %c0_i32_0 : i32, i32
  }
  func.func @transform_6(%arg0: i32, %arg1: i32) -> (i32, i32) {
    %c0_i32 = arith.constant 0 : i32
    %c0_i32_0 = arith.constant 0 : i32
    %c0_i32_1 = arith.constant 0 : i32
    return %c0_i32, %c0_i32_0 : i32, i32
  }
  func.func @transform_7(%arg0: i32, %arg1: i32) -> (i32, i32, i32) {
    %c0_i32 = arith.constant 0 : i32
    %c0_i32_0 = arith.constant 0 : i32
    return %arg0, %c0_i32, %arg1 : i32, i32, i32
  }
}

</mosaic_0001>

<llo_original>
// kernel: tpu_custom_call.1
$region0: #{tpu_custom_call.1}
  #allocation0 [shape = 'u32[]', space=smem, size = 0x4, offset = 0x4, fixed_abs, tag = 'smem constant byte address 0x4 - core index']
  #allocation1 [shape = 'u32[144,128]{1,0:T(1,128)}', space=vmem, size = 0x12000, scoped, tag = 'internal scratch']
  %s0 = inlined_call_operand.vmem [shape: f32[4,64,256], index: 0, kind: input, shape index: {}]
  %s1 = inlined_call_operand.hbm [shape: f32[4,32,256], index: 1, kind: input, shape index: {}]
  %s2 = inlined_call_operand.vmem [shape: f32[128,64], index: 2, kind: input, shape index: {}]
  %s3 = inlined_call_operand.vmem [shape: f32[128,32], index: 3, kind: input, shape index: {}]
  %s4 = inlined_call_operand.hbm [shape: f32[64,128], index: 4, kind: input, shape index: {}]
  %s5 = inlined_call_operand.vmem [shape: f32[128,1], index: 5, kind: input, shape index: {}]
  %s6 = inlined_call_operand.vmem [shape: f32[64,1], index: 6, kind: input, shape index: {}]
  %s7 = inlined_call_operand.hbm [shape: f32[4,64,256], index: 7, kind: output, shape index: {}]
  %s8 = sld [smem:[#allocation0]]
  $region69: #{tpu_custom_call.1} parent=0
    _
  %s10 = ssub.s32 1, %s8
  %s11 = scalar_select 0, %s10, %s8
  $region1: #{tpu_custom_call.1} parent=0
    #allocation2 [shape = 'u8[65536]{0}', space=vmem, size = 0x10000, scoped, tag = 'input window, operand 1']
    #allocation3 [shape = 's32[2]{0}', space=sflag, size = 0x8, scoped, tag = 'scoped memory for tpu_custom_call.1']
    #allocation4 [shape = 's32[2]{0}', space=sflag, size = 0x8, scoped, tag = 'scoped memory for tpu_custom_call.1']
    #allocation5 [shape = 'u8[32768]{0}', space=vmem, size = 0x8000, scoped, tag = 'input window, operand 4, single buffered']
    #allocation6 [shape = 's32[1]{0}', space=sflag, size = 0x4, scoped, tag = 'scoped memory for tpu_custom_call.1']
    #allocation7 [shape = 'u8[131072]{0}', space=vmem, size = 0x20000, scoped, tag = 'output window, operand 0']
    %12 = vsyncpa [#allocation3], 0
    %s13 = scalar_lea.sflag [#allocation3], 1
    %14 = vsyncpa %s13, 0
    %15 = vsyncpa [#allocation6], 0
    %16 = vsyncpa [#allocation4], 0
    %s17 = scalar_lea.sflag [#allocation4], 1
    %18 = vsyncpa %s17, 0
    loop: start=0, step=1, limit=6
    $region2: #{tpu_custom_call.1} parent=1 // loop_pre_header
      _
    $region3: #{tpu_custom_call.1} parent=1 // loop_header
      %s20 = sphi 0, %s24
      %p21 = scmp.ge.s32.totalorder %s20, 6
      %s27 = sphi 0, %s39
      %s28 = sphi 0, %s35
      %s29 = sphi 0, %s27
      %s30 = sphi 0, %s28
      %s31 = sphi 0, %s29
      %s32 = sphi 0, %s30
      %s44 = sphi 0, %s46
      %s47 = sphi 0, %s44
      %s48 = sphi 0, %s47
      %s64 = sphi 0, %s48
      %s72 = sphi 0, %s74
      %s75 = sphi 0, %s72
      %s76 = sphi 0, %s75
      %s92 = sphi 0, %s76
      %s96 = sphi 0, %s96
      %s98 = sphi 0, %s96
      %s99 = sphi 0, %s98
      %s113 = sphi 0, %s99
      %s117 = sphi 0, %s117
      %s119 = sphi 0, %s117
      %s120 = sphi 0, %s119
      %s134 = sphi 0, %s120
      %s138 = sphi 0, %s138
      %s140 = sphi 0, %s138
      %s141 = sphi 0, %s140
      %s155 = sphi 0, %s141
      %s159 = sphi 0, %s159
      %s161 = sphi 0, %s159
      %s162 = sphi 0, %s161
      %s176 = sphi 0, %s162
      %s180 = sphi 0, %s180
      %s182 = sphi 0, %s180
      %s183 = sphi 0, %s182
      %s197 = sphi 0, %s183
      %s205 = sphi 0, %s207
      %s208 = sphi 0, %s205
      %s209 = sphi 0, %s208
      %s225 = sphi 0, %s209
    $region4: #{tpu_custom_call.1} parent=1 // loop_header_branch
      %23 = sbr.rel (%p21) target = $region8
    $region5: #{tpu_custom_call.1} parent=1 // loop_body
      %s25 = ssub.s32 %s20, 1
      %s26 = ssub.s32 %s20, 2
      %s33 = sadd.s32 1, %s28
      %p34 = scmp.ge.s32.totalorder %s33, 1
      %s35 = scalar_select %p34, 0, %s33
      %s36 = sadd.s32 1, %s27
      %s37 = scalar_select %p34, %s36, %s27
      %p38 = scmp.ge.s32.totalorder %s37, 4
      %s39 = scalar_select %p38, 0, %s37
      %s40 = ssub.s32 %s27, %s39
      %s41 = ssub.s32 %s28, %s35
      %s42 = sor.u32 %s40, %s41
      %p43 = scmp.eq.s32.totalorder %s42, 0
      %s45 = sadd.s32 %s44, 1
      %s46 = scalar_select %p43, %s44, %s45
      %p49 = pneg %p43
      %p50 = scmp.eq.s32.totalorder %s20, 3
      %p51 = por %p49, %p50
      %p52 = scmp.ne.s32.totalorder %s44, %s47
      %p53 = scmp.eq.s32.totalorder %s20, 0
      %p54 = por %p52, %p53
      %p55 = scmp.ne.s32.totalorder %s44, %s47
      %p56 = scmp.eq.s32.totalorder %s25, 3
      %p57 = por %p55, %p56
      %p58 = scmp.ne.s32.totalorder %s47, %s48
      %p59 = scmp.eq.s32.totalorder %s25, 0
      %p60 = por %p58, %p59
      %p61 = scmp.ne.s32.totalorder %s47, %s48
      %p62 = scmp.eq.s32.totalorder %s26, 3
      %p63 = por %p61, %p62
      %p65 = scmp.ne.s32.totalorder %s48, %s64
      %p66 = scmp.eq.s32.totalorder %s26, 0
      %p67 = por %p65, %p66
      %s68 = ssub.s32 %s27, %s39
      %s69 = ssub.s32 %s28, %s35
      %s70 = sor.u32 %s68, %s69
      %p71 = scmp.eq.s32.totalorder %s70, 0
      %s73 = sadd.s32 %s72, 1
      %s74 = scalar_select %p71, %s72, %s73
      %p77 = pneg %p71
      %p78 = scmp.eq.s32.totalorder %s20, 3
      %p79 = por %p77, %p78
      %p80 = scmp.ne.s32.totalorder %s72, %s75
      %p81 = scmp.eq.s32.totalorder %s20, 0
      %p82 = por %p80, %p81
      %p83 = scmp.ne.s32.totalorder %s72, %s75
      %p84 = scmp.eq.s32.totalorder %s25, 3
      %p85 = por %p83, %p84
      %p86 = scmp.ne.s32.totalorder %s75, %s76
      %p87 = scmp.eq.s32.totalorder %s25, 0
      %p88 = por %p86, %p87
      %p89 = scmp.ne.s32.totalorder %s75, %s76
      %p90 = scmp.eq.s32.totalorder %s26, 3
      %p91 = por %p89, %p90
      %p93 = scmp.ne.s32.totalorder %s76, %s92
      %p94 = scmp.eq.s32.totalorder %s26, 0
      %p95 = por %p93, %p94
      %s97 = sadd.s32 %s96, 1
      %p100 = scmp.eq.s32.totalorder %s20, 3
      %p101 = scmp.ne.s32.totalorder %s96, %s98
      %p102 = scmp.eq.s32.totalorder %s20, 0
      %p103 = por %p101, %p102
      %p104 = scmp.ne.s32.totalorder %s96, %s98
      %p105 = scmp.eq.s32.totalorder %s25, 3
      %p106 = por %p104, %p105
      %p107 = scmp.ne.s32.totalorder %s98, %s99
      %p108 = scmp.eq.s32.totalorder %s25, 0
      %p109 = por %p107, %p108
      %p110 = scmp.ne.s32.totalorder %s98, %s99
      %p111 = scmp.eq.s32.totalorder %s26, 3
      %p112 = por %p110, %p111
      %p114 = scmp.ne.s32.totalorder %s99, %s113
      %p115 = scmp.eq.s32.totalorder %s26, 0
      %p116 = por %p114, %p115
      %s118 = sadd.s32 %s117, 1
      %p121 = scmp.eq.s32.totalorder %s20, 3
      %p122 = scmp.ne.s32.totalorder %s117, %s119
      %p123 = scmp.eq.s32.totalorder %s20, 0
      %p124 = por %p122, %p123
      %p125 = scmp.ne.s32.totalorder %s117, %s119
      %p126 = scmp.eq.s32.totalorder %s25, 3
      %p127 = por %p125, %p126
      %p128 = scmp.ne.s32.totalorder %s119, %s120
      %p129 = scmp.eq.s32.totalorder %s25, 0
      %p130 = por %p128, %p129
      %p131 = scmp.ne.s32.totalorder %s119, %s120
      %p132 = scmp.eq.s32.totalorder %s26, 3
      %p133 = por %p131, %p132
      %p135 = scmp.ne.s32.totalorder %s120, %s134
      %p136 = scmp.eq.s32.totalorder %s26, 0
      %p137 = por %p135, %p136
      %s139 = sadd.s32 %s138, 1
      %p142 = scmp.eq.s32.totalorder %s20, 3
      %p143 = scmp.ne.s32.totalorder %s138, %s140
      %p144 = scmp.eq.s32.totalorder %s20, 0
      %p145 = por %p143, %p144
      %p146 = scmp.ne.s32.totalorder %s138, %s140
      %p147 = scmp.eq.s32.totalorder %s25, 3
      %p148 = por %p146, %p147
      %p149 = scmp.ne.s32.totalorder %s140, %s141
      %p150 = scmp.eq.s32.totalorder %s25, 0
      %p151 = por %p149, %p150
      %p152 = scmp.ne.s32.totalorder %s140, %s141
      %p153 = scmp.eq.s32.totalorder %s26, 3
      %p154 = por %p152, %p153
      %p156 = scmp.ne.s32.totalorder %s141, %s155
      %p157 = scmp.eq.s32.totalorder %s26, 0
      %p158 = por %p156, %p157
      %s160 = sadd.s32 %s159, 1
      %p163 = scmp.eq.s32.totalorder %s20, 3
      %p164 = scmp.ne.s32.totalorder %s159, %s161
      %p165 = scmp.eq.s32.totalorder %s20, 0
      %p166 = por %p164, %p165
      %p167 = scmp.ne.s32.totalorder %s159, %s161
      %p168 = scmp.eq.s32.totalorder %s25, 3
      %p169 = por %p167, %p168
      %p170 = scmp.ne.s32.totalorder %s161, %s162
      %p171 = scmp.eq.s32.totalorder %s25, 0
      %p172 = por %p170, %p171
      %p173 = scmp.ne.s32.totalorder %s161, %s162
      %p174 = scmp.eq.s32.totalorder %s26, 3
      %p175 = por %p173, %p174
      %p177 = scmp.ne.s32.totalorder %s162, %s176
      %p178 = scmp.eq.s32.totalorder %s26, 0
      %p179 = por %p177, %p178
      %s181 = sadd.s32 %s180, 1
      %p184 = scmp.eq.s32.totalorder %s20, 3
      %p185 = scmp.ne.s32.totalorder %s180, %s182
      %p186 = scmp.eq.s32.totalorder %s20, 0
      %p187 = por %p185, %p186
      %p188 = scmp.ne.s32.totalorder %s180, %s182
      %p189 = scmp.eq.s32.totalorder %s25, 3
      %p190 = por %p188, %p189
      %p191 = scmp.ne.s32.totalorder %s182, %s183
      %p192 = scmp.eq.s32.totalorder %s25, 0
      %p193 = por %p191, %p192
      %p194 = scmp.ne.s32.totalorder %s182, %s183
      %p195 = scmp.eq.s32.totalorder %s26, 3
      %p196 = por %p194, %p195
      %p198 = scmp.ne.s32.totalorder %s183, %s197
      %p199 = scmp.eq.s32.totalorder %s26, 0
      %p200 = por %p198, %p199
      %s201 = ssub.s32 %s27, %s39
      %s202 = ssub.s32 %s28, %s35
      %s203 = sor.u32 %s201, %s202
      %p204 = scmp.eq.s32.totalorder %s203, 0
      %s206 = sadd.s32 %s205, 1
      %s207 = scalar_select %p204, %s205, %s206
      %p210 = pneg %p204
      %p211 = scmp.eq.s32.totalorder %s20, 3
      %p212 = por %p210, %p211
      %p213 = scmp.ne.s32.totalorder %s205, %s208
      %p214 = scmp.eq.s32.totalorder %s20, 0
      %p215 = por %p213, %p214
      %p216 = scmp.ne.s32.totalorder %s205, %s208
      %p217 = scmp.eq.s32.totalorder %s25, 3
      %p218 = por %p216, %p217
      %p219 = scmp.ne.s32.totalorder %s208, %s209
      %p220 = scmp.eq.s32.totalorder %s25, 0
      %p221 = por %p219, %p220
      %p222 = scmp.ne.s32.totalorder %s208, %s209
      %p223 = scmp.eq.s32.totalorder %s26, 3
      %p224 = por %p222, %p223
      %p226 = scmp.ne.s32.totalorder %s209, %s225
      %p227 = scmp.eq.s32.totalorder %s26, 0
      %p228 = por %p226, %p227
      %p229 = scmp.le.s32.totalorder 1, %s20
      %p230 = scmp.lt.s32.totalorder %s20, 5
      %p231 = pnand %p229, %p230
      %p232 = pneg %p231
      // Predicated region
      $region9: #{tpu_custom_call.1} parent=5 // pred_check
        _
      $region10: #{tpu_custom_call.1} parent=5 // pred_check_branch
        %234 = sbr.rel (%p231) target = $region12
      $region11: #{tpu_custom_call.1} parent=5 // pred_region
        %s235 = ssub.s32 %s20, 1
        // Predicated region
        $region13: #{tpu_custom_call.1} parent=11 // pred_check
          %p236 = pneg %p109
        $region14: #{tpu_custom_call.1} parent=11 // pred_check_branch
          %238 = sbr.rel (%p236) target = $region16
        $region15: #{tpu_custom_call.1} parent=11 // pred_region
          _
        $region16: #{tpu_custom_call.1} parent=11 // pred_fallthru
          _
        // Predicated region
        $region17: #{tpu_custom_call.1} parent=11 // pred_check
          %p239 = pneg %p130
        $region18: #{tpu_custom_call.1} parent=11 // pred_check_branch
          %241 = sbr.rel (%p239) target = $region20
        $region19: #{tpu_custom_call.1} parent=11 // pred_region
          _
        $region20: #{tpu_custom_call.1} parent=11 // pred_fallthru
          _
        // Predicated region
        $region21: #{tpu_custom_call.1} parent=11 // pred_check
          %p242 = pneg %p151
        $region22: #{tpu_custom_call.1} parent=11 // pred_check_branch
          %244 = sbr.rel (%p242) target = $region24
        $region23: #{tpu_custom_call.1} parent=11 // pred_region
          %s246 = ssub.s32 1024, 1024
          %247 = vsyncadd [#allocation6], %s246
          %s248 = sshll.u32 [#allocation5], 4
          %s249 = int_to_ptr.vmem [resolvable:$true] %s248
          %254 = dma.hbm_to_vmem [thread:$0]  %s4, 1024, %s249, [#allocation6], 128, 128, 8
        $region24: #{tpu_custom_call.1} parent=11 // pred_fallthru
          _
        // Predicated region
        $region25: #{tpu_custom_call.1} parent=11 // pred_check
          %p255 = pneg %p172
        $region26: #{tpu_custom_call.1} parent=11 // pred_check_branch
          %257 = sbr.rel (%p255) target = $region28
        $region27: #{tpu_custom_call.1} parent=11 // pred_region
          _
        $region28: #{tpu_custom_call.1} parent=11 // pred_fallthru
          _
        // Predicated region
        $region29: #{tpu_custom_call.1} parent=11 // pred_check
          %p258 = pneg %p193
        $region30: #{tpu_custom_call.1} parent=11 // pred_check_branch
          %260 = sbr.rel (%p258) target = $region32
        $region31: #{tpu_custom_call.1} parent=11 // pred_region
          _
        $region32: #{tpu_custom_call.1} parent=11 // pred_fallthru
          _
      $region12: #{tpu_custom_call.1} parent=5 // pred_fallthru
        _
      %p261 = scmp.lt.s32.totalorder %s20, 4
      // Predicated region
      $region33: #{tpu_custom_call.1} parent=5 // pred_check
        %p262 = pneg %p261
      $region34: #{tpu_custom_call.1} parent=5 // pred_check_branch
        %264 = sbr.rel (%p262) target = $region36
      $region35: #{tpu_custom_call.1} parent=5 // pred_region
        // Predicated region
        $region37: #{tpu_custom_call.1} parent=35 // pred_check
          %p265 = pneg %p54
        $region38: #{tpu_custom_call.1} parent=35 // pred_check_branch
          %267 = sbr.rel (%p265) target = $region40
        $region39: #{tpu_custom_call.1} parent=35 // pred_region
          %s268 = smul.u32 2, %s28
          %p269 = scmp.lt.s32.totalorder %s27, 3
          %s270 = scalar_select %p269, %s27, 3
          %p271 = scmp.lt.s32.totalorder %s268, 1
          %s272 = scalar_select %p271, %s268, 1
          %s273 = smul.addr %s270, 16
          %s274 = sadd.s32 %s272, %s273
          %s275 = smul.addr %s274, 8
          %s276 = scalar_lea.vmem %s0, %s275
          %s277 = smul.u32 2, %s28
        $region40: #{tpu_custom_call.1} parent=35 // pred_fallthru
          _
        // Predicated region
        $region41: #{tpu_custom_call.1} parent=35 // pred_check
          %p278 = pneg %p82
        $region42: #{tpu_custom_call.1} parent=35 // pred_check_branch
          %280 = sbr.rel (%p278) target = $region44
        $region43: #{tpu_custom_call.1} parent=35 // pred_region
          %s281 = sand.u32 %s72, 1
          %s282 = scalar_lea.sflag [#allocation3], %s281
          %s283 = sand.u32 %s72, 1
          %s284 = smul.addr %s283, 64
          %s285 = scalar_lea.vmem [#allocation2], %s284
          %s286 = smul.u32 2, %s28
          %s288 = ssub.s32 1024, 1024
          %289 = vsyncadd %s282, %s288
          %s290 = smul.addr %s27, 8
          %s291 = sadd.s32 %s286, %s290
          %s292 = smul.addr %s291, 128
          %s293 = scalar_lea.hbm %s1, %s292
          %s294 = sshll.u32 %s285, 4
          %s295 = int_to_ptr.vmem [resolvable:$true] %s294
          %300 = dma.hbm_to_vmem [thread:$0]  %s293, 1024, %s295, %s282, 256, 256, 16
        $region44: #{tpu_custom_call.1} parent=35 // pred_fallthru
          _
      $region36: #{tpu_custom_call.1} parent=5 // pred_fallthru
        _
      %p301 = scmp.le.s32.totalorder 1, %s20
      %p302 = scmp.lt.s32.totalorder %s20, 5
      %p303 = pnand %p301, %p302
      %p304 = pneg %p303
      // Predicated region
      $region45: #{tpu_custom_call.1} parent=5 // pred_check
        _
      $region46: #{tpu_custom_call.1} parent=5 // pred_check_branch
        %306 = sbr.rel (%p303) target = $region48
      $region47: #{tpu_custom_call.1} parent=5 // pred_region
        %s307 = ssub.s32 %s20, 1
        %s308 = sand.u32 %s75, 1
        %s309 = scalar_lea.sflag [#allocation3], %s308
        %s310 = sand.u32 %s75, 1
        %s311 = smul.addr %s310, 64
        %s312 = scalar_lea.vmem [#allocation2], %s311
        // Predicated region
        $region49: #{tpu_custom_call.1} parent=47 // pred_check
          %p313 = pneg %p88
        $region50: #{tpu_custom_call.1} parent=47 // pred_check_branch
          %315 = sbr.rel (%p313) target = $region52
        $region51: #{tpu_custom_call.1} parent=47 // pred_region
          %316 = dma.done %s309, 1024
        $region52: #{tpu_custom_call.1} parent=47 // pred_fallthru
          _
        // Predicated region
        $region53: #{tpu_custom_call.1} parent=47 // pred_check
          %p317 = pneg %p151
        $region54: #{tpu_custom_call.1} parent=47 // pred_check_branch
          %319 = sbr.rel (%p317) target = $region56
        $region55: #{tpu_custom_call.1} parent=47 // pred_region
          %320 = dma.done [#allocation6], 1024
        $region56: #{tpu_custom_call.1} parent=47 // pred_fallthru
          _
        %s321 = smul.u32 2, %s30
        %p322 = scmp.lt.s32.totalorder %s29, 3
        %s323 = scalar_select %p322, %s29, 3
        %p324 = scmp.lt.s32.totalorder %s321, 1
        %s325 = scalar_select %p324, %s321, 1
        %s326 = smul.addr %s323, 16
        %s327 = sadd.s32 %s325, %s326
        %s328 = smul.addr %s327, 8
        %s329 = scalar_lea.vmem %s0, %s328
        %p330 = pneg %p60
        %p331 = pneg %p57
        %s332 = sand.u32 %s75, 1
        %s333 = scalar_lea.sflag [#allocation3], %s332
        %s334 = sand.u32 %s75, 1
        %s335 = smul.addr %s334, 64
        %s336 = scalar_lea.vmem [#allocation2], %s335
        %p337 = pneg %p88
        %p338 = pneg %p85
        %p339 = pneg %p109
        %p340 = pneg %p106
        %p341 = pneg %p130
        %p342 = pneg %p127
        %p343 = pneg %p151
        %p344 = pneg %p148
        %p345 = pneg %p172
        %p346 = pneg %p169
        %p347 = pneg %p193
        %p348 = pneg %p190
        %p349 = pneg %p221
        %p350 = pneg %p218
        %s351 = sand.u32 %s208, 1
        %s352 = scalar_lea.sflag [#allocation4], %s351
        %s353 = sand.u32 %s208, 1
        %s354 = smul.addr %s353, 128
        %s355 = scalar_lea.vmem [#allocation7], %s354
        %s356 = smul.u32 2, %s30
        %p357 = scmp.lt.s32.totalorder %s29, 3
        %s358 = scalar_select %p357, %s29, 3
        %p359 = scmp.lt.s32.totalorder %s356, 1
        %s360 = scalar_select %p359, %s356, 1
        %s361 = smul.addr %s358, 16
        %s362 = sadd.s32 %s360, %s361
        %s363 = smul.addr %s362, 8
        %s364 = scalar_lea.vmem %s0, %s363
        %s365 = smul.u32 2, %s30
        %s366 = smul.u32 2, %s30
        %s367 = smul.u32 2, %s30
        %v368 = vld [vmem:[%s364] sm:$0xff]
        %v369 = vld [vmem:[%s364 + $0x8] sm:$0xff]
        %v370 = vld [vmem:[%s364 + $0x10] sm:$0xff]
        %v371 = vld [vmem:[%s364 + $0x18] sm:$0xff]
        %v372 = vld [vmem:[%s364 + $0x20] sm:$0xff]
        %v373 = vld [vmem:[%s364 + $0x28] sm:$0xff]
        %v374 = vld [vmem:[%s364 + $0x30] sm:$0xff]
        %v375 = vld [vmem:[%s364 + $0x38] sm:$0xff]
        %v376 = vld [vmem:[%s364 + $0x40] sm:$0xff]
        %v377 = vld [vmem:[%s364 + $0x48] sm:$0xff]
        %v378 = vld [vmem:[%s364 + $0x50] sm:$0xff]
        %v379 = vld [vmem:[%s364 + $0x58] sm:$0xff]
        %v380 = vld [vmem:[%s364 + $0x60] sm:$0xff]
        %v381 = vld [vmem:[%s364 + $0x68] sm:$0xff]
        %v382 = vld [vmem:[%s364 + $0x70] sm:$0xff]
        %v383 = vld [vmem:[%s364 + $0x78] sm:$0xff]
        %v384 = vld [vmem:[%s2] sm:$0xff]
        %v385 = vld [vmem:[%s2 + $0x8] sm:$0xff]
        %v386 = vld [vmem:[%s2 + $0x10] sm:$0xff]
        %v387 = vld [vmem:[%s2 + $0x18] sm:$0xff]
        %v388 = vld [vmem:[%s2 + $0x20] sm:$0xff]
        %v389 = vld [vmem:[%s2 + $0x28] sm:$0xff]
        %v390 = vld [vmem:[%s2 + $0x30] sm:$0xff]
        %v391 = vld [vmem:[%s2 + $0x38] sm:$0xff]
        %v392 = vld [vmem:[%s2 + $0x40] sm:$0xff]
        %v393 = vld [vmem:[%s2 + $0x48] sm:$0xff]
        %v394 = vld [vmem:[%s2 + $0x50] sm:$0xff]
        %v395 = vld [vmem:[%s2 + $0x58] sm:$0xff]
        %v396 = vld [vmem:[%s2 + $0x60] sm:$0xff]
        %v397 = vld [vmem:[%s2 + $0x68] sm:$0xff]
        %v398 = vld [vmem:[%s2 + $0x70] sm:$0xff]
        %v399 = vld [vmem:[%s2 + $0x78] sm:$0xff]
        %v400 = vld [vmem:[%s312] sm:$0xff]
        %v401 = vld [vmem:[%s312 + $0x8] sm:$0xff]
        %v402 = vld [vmem:[%s312 + $0x10] sm:$0xff]
        %v403 = vld [vmem:[%s312 + $0x18] sm:$0xff]
        %v404 = vld [vmem:[%s312 + $0x20] sm:$0xff]
        %v405 = vld [vmem:[%s312 + $0x28] sm:$0xff]
        %v406 = vld [vmem:[%s312 + $0x30] sm:$0xff]
        %v407 = vld [vmem:[%s312 + $0x38] sm:$0xff]
        %v408 = vld [vmem:[%s3] sm:$0xff]
        %v409 = vld [vmem:[%s3 + $0x8] sm:$0xff]
        %v410 = vld [vmem:[%s3 + $0x10] sm:$0xff]
        %v411 = vld [vmem:[%s3 + $0x18] sm:$0xff]
        %v412 = vld [vmem:[%s3 + $0x20] sm:$0xff]
        %v413 = vld [vmem:[%s3 + $0x28] sm:$0xff]
        %v414 = vld [vmem:[%s3 + $0x30] sm:$0xff]
        %v415 = vld [vmem:[%s3 + $0x38] sm:$0xff]
        %v416 = vld [vmem:[%s3 + $0x40] sm:$0xff]
        %v417 = vld [vmem:[%s3 + $0x48] sm:$0xff]
        %v418 = vld [vmem:[%s3 + $0x50] sm:$0xff]
        %v419 = vld [vmem:[%s3 + $0x58] sm:$0xff]
        %v420 = vld [vmem:[%s3 + $0x60] sm:$0xff]
        %v421 = vld [vmem:[%s3 + $0x68] sm:$0xff]
        %v422 = vld [vmem:[%s3 + $0x70] sm:$0xff]
        %v423 = vld [vmem:[%s3 + $0x78] sm:$0xff]
        %vm424 = vcmask 261120
        %v426 = vsel %vm424, %v408, 0
        %v429 = vsel %vm424, %v409, 0
        %v432 = vsel %vm424, %v410, 0
        %v435 = vsel %vm424, %v411, 0
        %v438 = vsel %vm424, %v412, 0
        %v441 = vsel %vm424, %v413, 0
        %v444 = vsel %vm424, %v414, 0
        %v447 = vsel %vm424, %v415, 0
        %v450 = vsel %vm424, %v416, 0
        %v453 = vsel %vm424, %v417, 0
        %v456 = vsel %vm424, %v418, 0
        %v459 = vsel %vm424, %v419, 0
        %v462 = vsel %vm424, %v420, 0
        %v465 = vsel %vm424, %v421, 0
        %v468 = vsel %vm424, %v422, 0
        %v471 = vsel %vm424, %v423, 0
        %473 = vmatprep.subr.mxu0 %v401
        %474 = vmatpush1.msra.mxu0 %v400
        %475 = vmatprep.subr.mxu0 %v403
        %476 = vmatpush1.msra.mxu0 %v402
        %477 = vmatprep.subr.mxu0 %v405
        %478 = vmatpush1.msra.mxu0 %v404
        %479 = vmatprep.subr.mxu0 %v407
        %480 = vmatpush1.msra.mxu0 %v406
        %481 = vmatprep.subr.mxu0 0.0
        %482 = vmatpush1.msra.mxu0 0.0
        %483 = vmatprep.subr.mxu0 0.0
        %484 = vmatpush1.msra.mxu0 0.0
        %485 = vmatprep.subr.mxu0 0.0
        %486 = vmatpush1.msra.mxu0 0.0
        %487 = vmatprep.subr.mxu0 0.0
        %488 = vmatpush1.msra.mxu0 0.0
        %489 = vmatprep.subr.mxu0 0.0
        %490 = vmatpush1.msra.mxu0 0.0
        %491 = vmatprep.subr.mxu0 0.0
        %492 = vmatpush1.msra.mxu0 0.0
        %493 = vmatprep.subr.mxu0 0.0
        %494 = vmatpush1.msra.mxu0 0.0
        %495 = vmatprep.subr.mxu0 0.0
        %496 = vmatpush1.msra.mxu0 0.0
        %497 = vmatprep.subr.mxu0 0.0
        %498 = vmatpush1.msra.mxu0 0.0
        %499 = vmatprep.subr.mxu0 0.0
        %500 = vmatpush1.msra.mxu0 0.0
        %501 = vmatprep.subr.mxu0 0.0
        %502 = vmatpush1.msra.mxu0 0.0
        %503 = vmatprep.subr.mxu0 0.0
        %504 = vmatpush1.msra.mxu0 0.0
        %505 = vmatprep.subr.mxu0 0.0
        %506 = vmatpush1.msra.mxu0 0.0
        %507 = vmatprep.subr.mxu0 0.0
        %508 = vmatpush1.msra.mxu0 0.0
        %509 = vmatprep.subr.mxu0 0.0
        %510 = vmatpush1.msra.mxu0 0.0
        %511 = vmatprep.subr.mxu0 0.0
        %512 = vmatpush1.msra.mxu0 0.0
        %513 = vmatprep.subr.mxu0 0.0
        %514 = vmatpush1.msra.mxu0 0.0
        %515 = vmatprep.subr.mxu0 0.0
        %516 = vmatpush1.msra.mxu0 0.0
        %517 = vmatprep.subr.mxu0 0.0
        %518 = vmatpush1.msra.mxu0 0.0
        %519 = vmatprep.subr.mxu0 0.0
        %520 = vmatpush1.msra.mxu0 0.0
        %521 = vmatprep.subr.mxu0 0.0
        %522 = vmatpush1.msra.mxu0 0.0
        %523 = vmatprep.subr.mxu0 0.0
        %524 = vmatpush1.msra.mxu0 0.0
        %525 = vmatprep.subr.mxu0 0.0
        %526 = vmatpush1.msra.mxu0 0.0
        %527 = vmatprep.subr.mxu0 0.0
        %528 = vmatpush1.msra.mxu0 0.0
        %529 = vmatprep.subr.mxu0 0.0
        %530 = vmatpush1.msra.mxu0 0.0
        %531 = vmatprep.subr.mxu0 0.0
        %532 = vmatpush1.msra.mxu0 0.0
        %533 = vmatprep.subr.mxu0 0.0
        %534 = vmatpush1.msra.mxu0 0.0
        %535 = vmatprep.subr.mxu0 0.0
        %536 = vmatpush1.msra.mxu0 0.0
        %537 = vmatprep.mubr.f32.mxu0 0.0
        %538 = vmatmul.mubr.f32.gmra.mrb[0].mxu0 %v426
        %v539 = vpop.f32.mrb[0].mxu0
        %v540 = vadd.f32 0.0, %v539
        %v541 = vpop.f32.mrb[0].mxu0
        %v542 = vadd.f32 0.0, %v541
        %543 = vmatprep.mubr.f32.mxu0 0.0
        %544 = vmatmul.mubr.f32.gmra.mrb[0].mxu0 %v429
        %v545 = vpop.f32.mrb[0].mxu0
        %v546 = vadd.f32 0.0, %v545
        %v547 = vpop.f32.mrb[0].mxu0
        %v548 = vadd.f32 0.0, %v547
        %549 = vmatprep.mubr.f32.mxu0 0.0
        %550 = vmatmul.mubr.f32.gmra.mrb[0].mxu0 %v432
        %v551 = vpop.f32.mrb[0].mxu0
        %v552 = vadd.f32 0.0, %v551
        %v553 = vpop.f32.mrb[0].mxu0
        %v554 = vadd.f32 0.0, %v553
        %555 = vmatprep.mubr.f32.mxu0 0.0
        %556 = vmatmul.mubr.f32.gmra.mrb[0].mxu0 %v435
        %v557 = vpop.f32.mrb[0].mxu0
        %v558 = vadd.f32 0.0, %v557
        %v559 = vpop.f32.mrb[0].mxu0
        %v560 = vadd.f32 0.0, %v559
        %561 = vmatprep.mubr.f32.mxu0 0.0
        %562 = vmatmul.mubr.f32.gmra.mrb[0].mxu0 %v438
        %v563 = vpop.f32.mrb[0].mxu0
        %v564 = vadd.f32 0.0, %v563
        %v565 = vpop.f32.mrb[0].mxu0
        %v566 = vadd.f32 0.0, %v565
        %567 = vmatprep.mubr.f32.mxu0 0.0
        %568 = vmatmul.mubr.f32.gmra.mrb[0].mxu0 %v441
        %v569 = vpop.f32.mrb[0].mxu0
        %v570 = vadd.f32 0.0, %v569
        %v571 = vpop.f32.mrb[0].mxu0
        %v572 = vadd.f32 0.0, %v571
        %573 = vmatprep.mubr.f32.mxu0 0.0
        %574 = vmatmul.mubr.f32.gmra.mrb[0].mxu0 %v444
        %v575 = vpop.f32.mrb[0].mxu0
        %v576 = vadd.f32 0.0, %v575
        %v577 = vpop.f32.mrb[0].mxu0
        %v578 = vadd.f32 0.0, %v577
        %579 = vmatprep.mubr.f32.mxu0 0.0
        %580 = vmatmul.mubr.f32.gmra.mrb[0].mxu0 %v447
        %v581 = vpop.f32.mrb[0].mxu0
        %v582 = vadd.f32 0.0, %v581
        %v583 = vpop.f32.mrb[0].mxu0
        %v584 = vadd.f32 0.0, %v583
        %585 = vmatprep.mubr.f32.mxu0 0.0
        %586 = vmatmul.mubr.f32.gmra.mrb[0].mxu0 %v450
        %v587 = vpop.f32.mrb[0].mxu0
        %v588 = vadd.f32 0.0, %v587
        %v589 = vpop.f32.mrb[0].mxu0
        %v590 = vadd.f32 0.0, %v589
        %591 = vmatprep.mubr.f32.mxu0 0.0
        %592 = vmatmul.mubr.f32.gmra.mrb[0].mxu0 %v453
        %v593 = vpop.f32.mrb[0].mxu0
        %v594 = vadd.f32 0.0, %v593
        %v595 = vpop.f32.mrb[0].mxu0
        %v596 = vadd.f32 0.0, %v595
        %597 = vmatprep.mubr.f32.mxu0 0.0
        %598 = vmatmul.mubr.f32.gmra.mrb[0].mxu0 %v456
        %v599 = vpop.f32.mrb[0].mxu0
        %v600 = vadd.f32 0.0, %v599
        %v601 = vpop.f32.mrb[0].mxu0
        %v602 = vadd.f32 0.0, %v601
        %603 = vmatprep.mubr.f32.mxu0 0.0
        %604 = vmatmul.mubr.f32.gmra.mrb[0].mxu0 %v459
        %v605 = vpop.f32.mrb[0].mxu0
        %v606 = vadd.f32 0.0, %v605
        %v607 = vpop.f32.mrb[0].mxu0
        %v608 = vadd.f32 0.0, %v607
        %609 = vmatprep.mubr.f32.mxu0 0.0
        %610 = vmatmul.mubr.f32.gmra.mrb[0].mxu0 %v462
        %v611 = vpop.f32.mrb[0].mxu0
        %v612 = vadd.f32 0.0, %v611
        %v613 = vpop.f32.mrb[0].mxu0
        %v614 = vadd.f32 0.0, %v613
        %615 = vmatprep.mubr.f32.mxu0 0.0
        %616 = vmatmul.mubr.f32.gmra.mrb[0].mxu0 %v465
        %v617 = vpop.f32.mrb[0].mxu0
        %v618 = vadd.f32 0.0, %v617
        %v619 = vpop.f32.mrb[0].mxu0
        %v620 = vadd.f32 0.0, %v619
        %621 = vmatprep.mubr.f32.mxu0 0.0
        %622 = vmatmul.mubr.f32.gmra.mrb[0].mxu0 %v468
        %v623 = vpop.f32.mrb[0].mxu0
        %v624 = vadd.f32 0.0, %v623
        %v625 = vpop.f32.mrb[0].mxu0
        %v626 = vadd.f32 0.0, %v625
        %627 = vmatprep.mubr.f32.mxu0 0.0
        %628 = vmatmul.mubr.f32.gmra.mrb[0].mxu0 %v471
        %v629 = vpop.f32.mrb[0].mxu0
        %v630 = vadd.f32 0.0, %v629
        %v631 = vpop.f32.mrb[0].mxu0
        %v632 = vadd.f32 0.0, %v631
        %633 = vdwg.mxu0
        %vm634 = vcmask 523264
        %v636 = vsel %vm634, %v384, 0
        %v639 = vsel %vm634, %v385, 0
        %v642 = vsel %vm634, %v386, 0
        %v645 = vsel %vm634, %v387, 0
        %v648 = vsel %vm634, %v388, 0
        %v651 = vsel %vm634, %v389, 0
        %v654 = vsel %vm634, %v390, 0
        %v657 = vsel %vm634, %v391, 0
        %v660 = vsel %vm634, %v392, 0
        %v663 = vsel %vm634, %v393, 0
        %v666 = vsel %vm634, %v394, 0
        %v669 = vsel %vm634, %v395, 0
        %v672 = vsel %vm634, %v396, 0
        %v675 = vsel %vm634, %v397, 0
        %v678 = vsel %vm634, %v398, 0
        %v681 = vsel %vm634, %v399, 0
        %683 = vmatprep.subr.mxu0 %v369
        %684 = vmatpush1.msra.mxu0 %v368
        %685 = vmatprep.subr.mxu0 %v371
        %686 = vmatpush1.msra.mxu0 %v370
        %687 = vmatprep.subr.mxu0 %v373
        %688 = vmatpush1.msra.mxu0 %v372
        %689 = vmatprep.subr.mxu0 %v375
        %690 = vmatpush1.msra.mxu0 %v374
        %691 = vmatprep.subr.mxu0 %v377
        %692 = vmatpush1.msra.mxu0 %v376
        %693 = vmatprep.subr.mxu0 %v379
        %694 = vmatpush1.msra.mxu0 %v378
        %695 = vmatprep.subr.mxu0 %v381
        %696 = vmatpush1.msra.mxu0 %v380
        %697 = vmatprep.subr.mxu0 %v383
        %698 = vmatpush1.msra.mxu0 %v382
        %699 = vmatprep.subr.mxu0 0.0
        %700 = vmatpush1.msra.mxu0 0.0
        %701 = vmatprep.subr.mxu0 0.0
        %702 = vmatpush1.msra.mxu0 0.0
        %703 = vmatprep.subr.mxu0 0.0
        %704 = vmatpush1.msra.mxu0 0.0
        %705 = vmatprep.subr.mxu0 0.0
        %706 = vmatpush1.msra.mxu0 0.0
        %707 = vmatprep.subr.mxu0 0.0
        %708 = vmatpush1.msra.mxu0 0.0
        %709 = vmatprep.subr.mxu0 0.0
        %710 = vmatpush1.msra.mxu0 0.0
        %711 = vmatprep.subr.mxu0 0.0
        %712 = vmatpush1.msra.mxu0 0.0
        %713 = vmatprep.subr.mxu0 0.0
        %714 = vmatpush1.msra.mxu0 0.0
        %715 = vmatprep.subr.mxu0 0.0
        %716 = vmatpush1.msra.mxu0 0.0
        %717 = vmatprep.subr.mxu0 0.0
        %718 = vmatpush1.msra.mxu0 0.0
        %719 = vmatprep.subr.mxu0 0.0
        %720 = vmatpush1.msra.mxu0 0.0
        %721 = vmatprep.subr.mxu0 0.0
        %722 = vmatpush1.msra.mxu0 0.0
        %723 = vmatprep.subr.mxu0 0.0
        %724 = vmatpush1.msra.mxu0 0.0
        %725 = vmatprep.subr.mxu0 0.0
        %726 = vmatpush1.msra.mxu0 0.0
        %727 = vmatprep.subr.mxu0 0.0
        %728 = vmatpush1.msra.mxu0 0.0
        %729 = vmatprep.subr.mxu0 0.0
        %730 = vmatpush1.msra.mxu0 0.0
        %731 = vmatprep.subr.mxu0 0.0
        %732 = vmatpush1.msra.mxu0 0.0
        %733 = vmatprep.subr.mxu0 0.0
        %734 = vmatpush1.msra.mxu0 0.0
        %735 = vmatprep.subr.mxu0 0.0
        %736 = vmatpush1.msra.mxu0 0.0
        %737 = vmatprep.subr.mxu0 0.0
        %738 = vmatpush1.msra.mxu0 0.0
        %739 = vmatprep.subr.mxu0 0.0
        %740 = vmatpush1.msra.mxu0 0.0
        %741 = vmatprep.subr.mxu0 0.0
        %742 = vmatpush1.msra.mxu0 0.0
        %743 = vmatprep.subr.mxu0 0.0
        %744 = vmatpush1.msra.mxu0 0.0
        %745 = vmatprep.subr.mxu0 0.0
        %746 = vmatpush1.msra.mxu0 0.0
        %747 = vmatprep.mubr.f32.mxu0 0.0
        %748 = vmatmul.mubr.f32.gmra.mrb[0].mxu0 %v636
        %v749 = vpop.f32.mrb[0].mxu0
        %v750 = vadd.f32 %v540, %v749
        %v751 = vpop.f32.mrb[0].mxu0
        %v752 = vadd.f32 %v542, %v751
        %753 = vmatprep.mubr.f32.mxu0 0.0
        %754 = vmatmul.mubr.f32.gmra.mrb[0].mxu0 %v639
        %v755 = vpop.f32.mrb[0].mxu0
        %v756 = vadd.f32 %v546, %v755
        %v757 = vpop.f32.mrb[0].mxu0
        %v758 = vadd.f32 %v548, %v757
        %759 = vmatprep.mubr.f32.mxu0 0.0
        %760 = vmatmul.mubr.f32.gmra.mrb[0].mxu0 %v642
        %v761 = vpop.f32.mrb[0].mxu0
        %v762 = vadd.f32 %v552, %v761
        %v763 = vpop.f32.mrb[0].mxu0
        %v764 = vadd.f32 %v554, %v763
        %765 = vmatprep.mubr.f32.mxu0 0.0
        %766 = vmatmul.mubr.f32.gmra.mrb[0].mxu0 %v645
        %v767 = vpop.f32.mrb[0].mxu0
        %v768 = vadd.f32 %v558, %v767
        %v769 = vpop.f32.mrb[0].mxu0
        %v770 = vadd.f32 %v560, %v769
        %771 = vmatprep.mubr.f32.mxu0 0.0
        %772 = vmatmul.mubr.f32.gmra.mrb[0].mxu0 %v648
        %v773 = vpop.f32.mrb[0].mxu0
        %v774 = vadd.f32 %v564, %v773
        %v775 = vpop.f32.mrb[0].mxu0
        %v776 = vadd.f32 %v566, %v775
        %777 = vmatprep.mubr.f32.mxu0 0.0
        %778 = vmatmul.mubr.f32.gmra.mrb[0].mxu0 %v651
        %v779 = vpop.f32.mrb[0].mxu0
        %v780 = vadd.f32 %v570, %v779
        %v781 = vpop.f32.mrb[0].mxu0
        %v782 = vadd.f32 %v572, %v781
        %783 = vmatprep.mubr.f32.mxu0 0.0
        %784 = vmatmul.mubr.f32.gmra.mrb[0].mxu0 %v654
        %v785 = vpop.f32.mrb[0].mxu0
        %v786 = vadd.f32 %v576, %v785
        %v787 = vpop.f32.mrb[0].mxu0
        %v788 = vadd.f32 %v578, %v787
        %789 = vmatprep.mubr.f32.mxu0 0.0
        %790 = vmatmul.mubr.f32.gmra.mrb[0].mxu0 %v657
        %v791 = vpop.f32.mrb[0].mxu0
        %v792 = vadd.f32 %v582, %v791
        %v793 = vpop.f32.mrb[0].mxu0
        %v794 = vadd.f32 %v584, %v793
        %795 = vmatprep.mubr.f32.mxu0 0.0
        %796 = vmatmul.mubr.f32.gmra.mrb[0].mxu0 %v660
        %v797 = vpop.f32.mrb[0].mxu0
        %v798 = vadd.f32 %v588, %v797
        %v799 = vpop.f32.mrb[0].mxu0
        %v800 = vadd.f32 %v590, %v799
        %801 = vmatprep.mubr.f32.mxu0 0.0
        %802 = vmatmul.mubr.f32.gmra.mrb[0].mxu0 %v663
        %v803 = vpop.f32.mrb[0].mxu0
        %v804 = vadd.f32 %v594, %v803
        %v805 = vpop.f32.mrb[0].mxu0
        %v806 = vadd.f32 %v596, %v805
        %807 = vmatprep.mubr.f32.mxu0 0.0
        %808 = vmatmul.mubr.f32.gmra.mrb[0].mxu0 %v666
        %v809 = vpop.f32.mrb[0].mxu0
        %v810 = vadd.f32 %v600, %v809
        %v811 = vpop.f32.mrb[0].mxu0
        %v812 = vadd.f32 %v602, %v811
        %813 = vmatprep.mubr.f32.mxu0 0.0
        %814 = vmatmul.mubr.f32.gmra.mrb[0].mxu0 %v669
        %v815 = vpop.f32.mrb[0].mxu0
        %v816 = vadd.f32 %v606, %v815
        %v817 = vpop.f32.mrb[0].mxu0
        %v818 = vadd.f32 %v608, %v817
        %819 = vmatprep.mubr.f32.mxu0 0.0
        %820 = vmatmul.mubr.f32.gmra.mrb[0].mxu0 %v672
        %v821 = vpop.f32.mrb[0].mxu0
        %v822 = vadd.f32 %v612, %v821
        %v823 = vpop.f32.mrb[0].mxu0
        %v824 = vadd.f32 %v614, %v823
        %825 = vmatprep.mubr.f32.mxu0 0.0
        %826 = vmatmul.mubr.f32.gmra.mrb[0].mxu0 %v675
        %v827 = vpop.f32.mrb[0].mxu0
        %v828 = vadd.f32 %v618, %v827
        %v829 = vpop.f32.mrb[0].mxu0
        %v830 = vadd.f32 %v620, %v829
        %831 = vmatprep.mubr.f32.mxu0 0.0
        %832 = vmatmul.mubr.f32.gmra.mrb[0].mxu0 %v678
        %v833 = vpop.f32.mrb[0].mxu0
        %v834 = vadd.f32 %v624, %v833
        %v835 = vpop.f32.mrb[0].mxu0
        %v836 = vadd.f32 %v626, %v835
        %837 = vmatprep.mubr.f32.mxu0 0.0
        %838 = vmatmul.mubr.f32.gmra.mrb[0].mxu0 %v681
        %v839 = vpop.f32.mrb[0].mxu0
        %v840 = vadd.f32 %v630, %v839
        %v841 = vpop.f32.mrb[0].mxu0
        %v842 = vadd.f32 %v632, %v841
        %843 = vdwg.mxu0
        %v844 = vld [vmem:[%s5] sm:$0xff]
        %v845 = vld [vmem:[%s5 + $0x8] sm:$0xff]
        %v846 = vld [vmem:[%s5 + $0x10] sm:$0xff]
        %v847 = vld [vmem:[%s5 + $0x18] sm:$0xff]
        %v848 = vld [vmem:[%s5 + $0x20] sm:$0xff]
        %v849 = vld [vmem:[%s5 + $0x28] sm:$0xff]
        %v850 = vld [vmem:[%s5 + $0x30] sm:$0xff]
        %v851 = vld [vmem:[%s5 + $0x38] sm:$0xff]
        %v852 = vld [vmem:[%s5 + $0x40] sm:$0xff]
        %v853 = vld [vmem:[%s5 + $0x48] sm:$0xff]
        %v854 = vld [vmem:[%s5 + $0x50] sm:$0xff]
        %v855 = vld [vmem:[%s5 + $0x58] sm:$0xff]
        %v856 = vld [vmem:[%s5 + $0x60] sm:$0xff]
        %v857 = vld [vmem:[%s5 + $0x68] sm:$0xff]
        %v858 = vld [vmem:[%s5 + $0x70] sm:$0xff]
        %v859 = vld [vmem:[%s5 + $0x78] sm:$0xff]
        %861 = vset.pattern.permute.xlu0 0
        %862 = vperm.xlu0 %861, %v844
        %v863 = vpop.permute.xlu0 %862
        %866 = vset.pattern.permute.xlu0 0
        %867 = vperm.xlu0 %866, %v845
        %v868 = vpop.permute.xlu0 %867
        %871 = vset.pattern.permute.xlu0 0
        %872 = vperm.xlu0 %871, %v846
        %v873 = vpop.permute.xlu0 %872
        %876 = vset.pattern.permute.xlu0 0
        %877 = vperm.xlu0 %876, %v847
        %v878 = vpop.permute.xlu0 %877
        %881 = vset.pattern.permute.xlu0 0
        %882 = vperm.xlu0 %881, %v848
        %v883 = vpop.permute.xlu0 %882
        %886 = vset.pattern.permute.xlu0 0
        %887 = vperm.xlu0 %886, %v849
        %v888 = vpop.permute.xlu0 %887
        %891 = vset.pattern.permute.xlu0 0
        %892 = vperm.xlu0 %891, %v850
        %v893 = vpop.permute.xlu0 %892
        %896 = vset.pattern.permute.xlu0 0
        %897 = vperm.xlu0 %896, %v851
        %v898 = vpop.permute.xlu0 %897
        %901 = vset.pattern.permute.xlu0 0
        %902 = vperm.xlu0 %901, %v852
        %v903 = vpop.permute.xlu0 %902
        %906 = vset.pattern.permute.xlu0 0
        %907 = vperm.xlu0 %906, %v853
        %v908 = vpop.permute.xlu0 %907
        %911 = vset.pattern.permute.xlu0 0
        %912 = vperm.xlu0 %911, %v854
        %v913 = vpop.permute.xlu0 %912
        %916 = vset.pattern.permute.xlu0 0
        %917 = vperm.xlu0 %916, %v855
        %v918 = vpop.permute.xlu0 %917
        %921 = vset.pattern.permute.xlu0 0
        %922 = vperm.xlu0 %921, %v856
        %v923 = vpop.permute.xlu0 %922
        %926 = vset.pattern.permute.xlu0 0
        %927 = vperm.xlu0 %926, %v857
        %v928 = vpop.permute.xlu0 %927
        %931 = vset.pattern.permute.xlu0 0
        %932 = vperm.xlu0 %931, %v858
        %v933 = vpop.permute.xlu0 %932
        %936 = vset.pattern.permute.xlu0 0
        %937 = vperm.xlu0 %936, %v859
        %v938 = vpop.permute.xlu0 %937
        %v940 = vadd.f32 %v750, %v863
        %v941 = vadd.f32 %v752, %v863
        %v942 = vadd.f32 %v756, %v868
        %v943 = vadd.f32 %v758, %v868
        %v944 = vadd.f32 %v762, %v873
        %v945 = vadd.f32 %v764, %v873
        %v946 = vadd.f32 %v768, %v878
        %v947 = vadd.f32 %v770, %v878
        %v948 = vadd.f32 %v774, %v883
        %v949 = vadd.f32 %v776, %v883
        %v950 = vadd.f32 %v780, %v888
        %v951 = vadd.f32 %v782, %v888
        %v952 = vadd.f32 %v786, %v893
        %v953 = vadd.f32 %v788, %v893
        %v954 = vadd.f32 %v792, %v898
        %v955 = vadd.f32 %v794, %v898
        %v956 = vadd.f32 %v798, %v903
        %v957 = vadd.f32 %v800, %v903
        %v958 = vadd.f32 %v804, %v908
        %v959 = vadd.f32 %v806, %v908
        %v960 = vadd.f32 %v810, %v913
        %v961 = vadd.f32 %v812, %v913
        %v962 = vadd.f32 %v816, %v918
        %v963 = vadd.f32 %v818, %v918
        %v964 = vadd.f32 %v822, %v923
        %v965 = vadd.f32 %v824, %v923
        %v966 = vadd.f32 %v828, %v928
        %v967 = vadd.f32 %v830, %v928
        %v968 = vadd.f32 %v834, %v933
        %v969 = vadd.f32 %v836, %v933
        %v970 = vadd.f32 %v840, %v938
        %v971 = vadd.f32 %v842, %v938
        %v972 = vmax.f32 %v940, 0.0
        %v973 = vmax.f32 %v941, 0.0
        %v974 = vmax.f32 %v942, 0.0
        %v975 = vmax.f32 %v943, 0.0
        %v976 = vmax.f32 %v944, 0.0
        %v977 = vmax.f32 %v945, 0.0
        %v978 = vmax.f32 %v946, 0.0
        %v979 = vmax.f32 %v947, 0.0
        %v980 = vmax.f32 %v948, 0.0
        %v981 = vmax.f32 %v949, 0.0
        %v982 = vmax.f32 %v950, 0.0
        %v983 = vmax.f32 %v951, 0.0
        %v984 = vmax.f32 %v952, 0.0
        %v985 = vmax.f32 %v953, 0.0
        %v986 = vmax.f32 %v954, 0.0
        %v987 = vmax.f32 %v955, 0.0
        %v988 = vmax.f32 %v956, 0.0
        %v989 = vmax.f32 %v957, 0.0
        %v990 = vmax.f32 %v958, 0.0
        %v991 = vmax.f32 %v959, 0.0
        %v992 = vmax.f32 %v960, 0.0
        %v993 = vmax.f32 %v961, 0.0
        %v994 = vmax.f32 %v962, 0.0
        %v995 = vmax.f32 %v963, 0.0
        %v996 = vmax.f32 %v964, 0.0
        %v997 = vmax.f32 %v965, 0.0
        %v998 = vmax.f32 %v966, 0.0
        %v999 = vmax.f32 %v967, 0.0
        %v1000 = vmax.f32 %v968, 0.0
        %v1001 = vmax.f32 %v969, 0.0
        %v1002 = vmax.f32 %v970, 0.0
        %v1003 = vmax.f32 %v971, 0.0
        %v1004 = vld [vmem:[#allocation5] sm:$0xff]
        %v1005 = vld [vmem:[#allocation5 + $0x8] sm:$0xff]
        %v1006 = vld [vmem:[#allocation5 + $0x10] sm:$0xff]
        %v1007 = vld [vmem:[#allocation5 + $0x18] sm:$0xff]
        %v1008 = vld [vmem:[#allocation5 + $0x20] sm:$0xff]
        %v1009 = vld [vmem:[#allocation5 + $0x28] sm:$0xff]
        %v1010 = vld [vmem:[#allocation5 + $0x30] sm:$0xff]
        %v1011 = vld [vmem:[#allocation5 + $0x38] sm:$0xff]
        %v1012 = vld [vmem:[%s6] sm:$0xff]
        %v1013 = vld [vmem:[%s6 + $0x8] sm:$0xff]
        %v1014 = vld [vmem:[%s6 + $0x10] sm:$0xff]
        %v1015 = vld [vmem:[%s6 + $0x18] sm:$0xff]
        %v1016 = vld [vmem:[%s6 + $0x20] sm:$0xff]
        %v1017 = vld [vmem:[%s6 + $0x28] sm:$0xff]
        %v1018 = vld [vmem:[%s6 + $0x30] sm:$0xff]
        %v1019 = vld [vmem:[%s6 + $0x38] sm:$0xff]
        %1021 = vset.pattern.permute.xlu0 0
        %1022 = vperm.xlu0 %1021, %v1012
        %v1023 = vpop.permute.xlu0 %1022
        %1026 = vset.pattern.permute.xlu0 0
        %1027 = vperm.xlu0 %1026, %v1013
        %v1028 = vpop.permute.xlu0 %1027
        %1031 = vset.pattern.permute.xlu0 0
        %1032 = vperm.xlu0 %1031, %v1014
        %v1033 = vpop.permute.xlu0 %1032
        %1036 = vset.pattern.permute.xlu0 0
        %1037 = vperm.xlu0 %1036, %v1015
        %v1038 = vpop.permute.xlu0 %1037
        %1041 = vset.pattern.permute.xlu0 0
        %1042 = vperm.xlu0 %1041, %v1016
        %v1043 = vpop.permute.xlu0 %1042
        %1046 = vset.pattern.permute.xlu0 0
        %1047 = vperm.xlu0 %1046, %v1017
        %v1048 = vpop.permute.xlu0 %1047
        %1051 = vset.pattern.permute.xlu0 0
        %1052 = vperm.xlu0 %1051, %v1018
        %v1053 = vpop.permute.xlu0 %1052
        %1056 = vset.pattern.permute.xlu0 0
        %1057 = vperm.xlu0 %1056, %v1019
        %v1058 = vpop.permute.xlu0 %1057
        %1060 = vmatprep.subr.mxu0 %v973
        %1061 = vmatpush1.msra.mxu0 %v972
        %1062 = vmatprep.subr.mxu0 %v975
        %1063 = vmatpush1.msra.mxu0 %v974
        %1064 = vmatprep.subr.mxu0 %v977
        %1065 = vmatpush1.msra.mxu0 %v976
        %1066 = vmatprep.subr.mxu0 %v979
        %1067 = vmatpush1.msra.mxu0 %v978
        %1068 = vmatprep.subr.mxu0 %v981
        %1069 = vmatpush1.msra.mxu0 %v980
        %1070 = vmatprep.subr.mxu0 %v983
        %1071 = vmatpush1.msra.mxu0 %v982
        %1072 = vmatprep.subr.mxu0 %v985
        %1073 = vmatpush1.msra.mxu0 %v984
        %1074 = vmatprep.subr.mxu0 %v987
        %1075 = vmatpush1.msra.mxu0 %v986
        %1076 = vmatprep.subr.mxu0 %v989
        %1077 = vmatpush1.msra.mxu0 %v988
        %1078 = vmatprep.subr.mxu0 %v991
        %1079 = vmatpush1.msra.mxu0 %v990
        %1080 = vmatprep.subr.mxu0 %v993
        %1081 = vmatpush1.msra.mxu0 %v992
        %1082 = vmatprep.subr.mxu0 %v995
        %1083 = vmatpush1.msra.mxu0 %v994
        %1084 = vmatprep.subr.mxu0 %v997
        %1085 = vmatpush1.msra.mxu0 %v996
        %1086 = vmatprep.subr.mxu0 %v999
        %1087 = vmatpush1.msra.mxu0 %v998
        %1088 = vmatprep.subr.mxu0 %v1001
        %1089 = vmatpush1.msra.mxu0 %v1000
        %1090 = vmatprep.subr.mxu0 %v1003
        %1091 = vmatpush1.msra.mxu0 %v1002
        %1092 = vmatprep.subr.mxu0 0.0
        %1093 = vmatpush1.msra.mxu0 0.0
        %1094 = vmatprep.subr.mxu0 0.0
        %1095 = vmatpush1.msra.mxu0 0.0
        %1096 = vmatprep.subr.mxu0 0.0
        %1097 = vmatpush1.msra.mxu0 0.0
        %1098 = vmatprep.subr.mxu0 0.0
        %1099 = vmatpush1.msra.mxu0 0.0
        %1100 = vmatprep.subr.mxu0 0.0
        %1101 = vmatpush1.msra.mxu0 0.0
        %1102 = vmatprep.subr.mxu0 0.0
        %1103 = vmatpush1.msra.mxu0 0.0
        %1104 = vmatprep.subr.mxu0 0.0
        %1105 = vmatpush1.msra.mxu0 0.0
        %1106 = vmatprep.subr.mxu0 0.0
        %1107 = vmatpush1.msra.mxu0 0.0
        %1108 = vmatprep.subr.mxu0 0.0
        %1109 = vmatpush1.msra.mxu0 0.0
        %1110 = vmatprep.subr.mxu0 0.0
        %1111 = vmatpush1.msra.mxu0 0.0
        %1112 = vmatprep.subr.mxu0 0.0
        %1113 = vmatpush1.msra.mxu0 0.0
        %1114 = vmatprep.subr.mxu0 0.0
        %1115 = vmatpush1.msra.mxu0 0.0
        %1116 = vmatprep.subr.mxu0 0.0
        %1117 = vmatpush1.msra.mxu0 0.0
        %1118 = vmatprep.subr.mxu0 0.0
        %1119 = vmatpush1.msra.mxu0 0.0
        %1120 = vmatprep.subr.mxu0 0.0
        %1121 = vmatpush1.msra.mxu0 0.0
        %1122 = vmatprep.subr.mxu0 0.0
        %1123 = vmatpush1.msra.mxu0 0.0
        %1124 = vmatprep.mubr.f32.mxu0 0.0
        %1125 = vmatmul.mubr.f32.gmra.mrb[0].mxu0 %v1004
        %v1126 = vpop.f32.mrb[0].mxu0
        %v1127 = vadd.f32 %v1023, %v1126
        %v1128 = vpop.f32.mrb[0].mxu0
        %v1129 = vadd.f32 %v1023, %v1128
        %1130 = vmatprep.mubr.f32.mxu0 0.0
        %1131 = vmatmul.mubr.f32.gmra.mrb[0].mxu0 %v1005
        %v1132 = vpop.f32.mrb[0].mxu0
        %v1133 = vadd.f32 %v1028, %v1132
        %v1134 = vpop.f32.mrb[0].mxu0
        %v1135 = vadd.f32 %v1028, %v1134
        %1136 = vmatprep.mubr.f32.mxu0 0.0
        %1137 = vmatmul.mubr.f32.gmra.mrb[0].mxu0 %v1006
        %v1138 = vpop.f32.mrb[0].mxu0
        %v1139 = vadd.f32 %v1033, %v1138
        %v1140 = vpop.f32.mrb[0].mxu0
        %v1141 = vadd.f32 %v1033, %v1140
        %1142 = vmatprep.mubr.f32.mxu0 0.0
        %1143 = vmatmul.mubr.f32.gmra.mrb[0].mxu0 %v1007
        %v1144 = vpop.f32.mrb[0].mxu0
        %v1145 = vadd.f32 %v1038, %v1144
        %v1146 = vpop.f32.mrb[0].mxu0
        %v1147 = vadd.f32 %v1038, %v1146
        %1148 = vmatprep.mubr.f32.mxu0 0.0
        %1149 = vmatmul.mubr.f32.gmra.mrb[0].mxu0 %v1008
        %v1150 = vpop.f32.mrb[0].mxu0
        %v1151 = vadd.f32 %v1043, %v1150
        %v1152 = vpop.f32.mrb[0].mxu0
        %v1153 = vadd.f32 %v1043, %v1152
        %1154 = vmatprep.mubr.f32.mxu0 0.0
        %1155 = vmatmul.mubr.f32.gmra.mrb[0].mxu0 %v1009
        %v1156 = vpop.f32.mrb[0].mxu0
        %v1157 = vadd.f32 %v1048, %v1156
        %v1158 = vpop.f32.mrb[0].mxu0
        %v1159 = vadd.f32 %v1048, %v1158
        %1160 = vmatprep.mubr.f32.mxu0 0.0
        %1161 = vmatmul.mubr.f32.gmra.mrb[0].mxu0 %v1010
        %v1162 = vpop.f32.mrb[0].mxu0
        %v1163 = vadd.f32 %v1053, %v1162
        %v1164 = vpop.f32.mrb[0].mxu0
        %v1165 = vadd.f32 %v1053, %v1164
        %1166 = vmatprep.mubr.f32.mxu0 0.0
        %1167 = vmatmul.mubr.f32.gmra.mrb[0].mxu0 %v1011
        %v1168 = vpop.f32.mrb[0].mxu0
        %v1169 = vadd.f32 %v1058, %v1168
        %v1170 = vpop.f32.mrb[0].mxu0
        %v1171 = vadd.f32 %v1058, %v1170
        %1172 = vdwg.mxu0
        %v1173 = vmax.f32 %v1127, 0.0
        %v1174 = vmax.f32 %v1129, 0.0
        %v1175 = vmax.f32 %v1133, 0.0
        %v1176 = vmax.f32 %v1135, 0.0
        %v1177 = vmax.f32 %v1139, 0.0
        %v1178 = vmax.f32 %v1141, 0.0
        %v1179 = vmax.f32 %v1145, 0.0
        %v1180 = vmax.f32 %v1147, 0.0
        %v1181 = vmax.f32 %v1151, 0.0
        %v1182 = vmax.f32 %v1153, 0.0
        %v1183 = vmax.f32 %v1157, 0.0
        %v1184 = vmax.f32 %v1159, 0.0
        %v1185 = vmax.f32 %v1163, 0.0
        %v1186 = vmax.f32 %v1165, 0.0
        %v1187 = vmax.f32 %v1169, 0.0
        %v1188 = vmax.f32 %v1171, 0.0
        %1189 = vst [vmem:[%s355] sm:$0xff] %v1173
        %1190 = vst [vmem:[%s355 + $0x8] sm:$0xff] %v1174
        %1191 = vst [vmem:[%s355 + $0x10] sm:$0xff] %v1175
        %1192 = vst [vmem:[%s355 + $0x18] sm:$0xff] %v1176
        %1193 = vst [vmem:[%s355 + $0x20] sm:$0xff] %v1177
        %1194 = vst [vmem:[%s355 + $0x28] sm:$0xff] %v1178
        %1195 = vst [vmem:[%s355 + $0x30] sm:$0xff] %v1179
        %1196 = vst [vmem:[%s355 + $0x38] sm:$0xff] %v1180
        %1197 = vst [vmem:[%s355 + $0x40] sm:$0xff] %v1181
        %1198 = vst [vmem:[%s355 + $0x48] sm:$0xff] %v1182
        %1199 = vst [vmem:[%s355 + $0x50] sm:$0xff] %v1183
        %1200 = vst [vmem:[%s355 + $0x58] sm:$0xff] %v1184
        %1201 = vst [vmem:[%s355 + $0x60] sm:$0xff] %v1185
        %1202 = vst [vmem:[%s355 + $0x68] sm:$0xff] %v1186
        %1203 = vst [vmem:[%s355 + $0x70] sm:$0xff] %v1187
        %1204 = vst [vmem:[%s355 + $0x78] sm:$0xff] %v1188
        %s1205 = sand.u32 %s208, 1
        %s1206 = scalar_lea.sflag [#allocation4], %s1205
        %s1207 = sand.u32 %s208, 1
        %s1208 = smul.addr %s1207, 128
        %s1209 = scalar_lea.vmem [#allocation7], %s1208
        // Predicated region
        $region57: #{tpu_custom_call.1} parent=47 // pred_check
          %p1210 = pneg %p218
        $region58: #{tpu_custom_call.1} parent=47 // pred_check_branch
          %1212 = sbr.rel (%p1210) target = $region60
        $region59: #{tpu_custom_call.1} parent=47 // pred_region
          %s1213 = smul.u32 2, %s30
          %s1215 = ssub.s32 2048, 2048
          %1216 = vsyncadd %s1206, %s1215
          %s1217 = smul.addr %s29, 16
          %s1218 = sadd.s32 %s1213, %s1217
          %s1219 = smul.addr %s1218, 128
          %s1220 = scalar_lea.hbm %s7, %s1219
          %s1221 = sshll.u32 %s1209, 4
          %s1222 = int_to_ptr.vmem [resolvable:$true] %s1221
          %1227 = dma.vmem_to_hbm [thread:$0]  %s1222, 2048, %s1220, %s1206, 256, 256, 16
        $region60: #{tpu_custom_call.1} parent=47 // pred_fallthru
          _
      $region48: #{tpu_custom_call.1} parent=5 // pred_fallthru
        _
      %p1228 = scmp.le.s32.totalorder 2, %s20
      // Predicated region
      $region61: #{tpu_custom_call.1} parent=5 // pred_check
        %p1229 = pneg %p1228
      $region62: #{tpu_custom_call.1} parent=5 // pred_check_branch
        %1231 = sbr.rel (%p1229) target = $region64
      $region63: #{tpu_custom_call.1} parent=5 // pred_region
        %s1232 = ssub.s32 %s20, 2
        // Predicated region
        $region65: #{tpu_custom_call.1} parent=63 // pred_check
          %p1233 = pneg %p224
        $region66: #{tpu_custom_call.1} parent=63 // pred_check_branch
          %1235 = sbr.rel (%p1233) target = $region68
        $region67: #{tpu_custom_call.1} parent=63 // pred_region
          %s1236 = sand.u32 %s209, 1
          %s1237 = scalar_lea.sflag [#allocation4], %s1236
          %s1238 = sand.u32 %s209, 1
          %s1239 = smul.addr %s1238, 128
          %s1240 = scalar_lea.vmem [#allocation7], %s1239
          %1241 = dma.done %s1237, 2048
        $region68: #{tpu_custom_call.1} parent=63 // pred_fallthru
          _
      $region64: #{tpu_custom_call.1} parent=5 // pred_fallthru
        _
    $region6: #{tpu_custom_call.1} parent=1 // loop_footer
      %s24 = sadd.s32 1, %s20
    $region7: #{tpu_custom_call.1} parent=1 // loop_footer_branch
      %19 = sbr.rel target = $region3
    $region8: #{tpu_custom_call.1} parent=1 // loop_exit
      _
    %1242 = vsyncpa [#allocation3], 1
    %s1243 = scalar_lea.sflag [#allocation3], 1
    %1244 = vsyncpa %s1243, 1
    %1245 = vsyncpa [#allocation6], 1
    %1246 = vsyncpa [#allocation4], 1
    %s1247 = scalar_lea.sflag [#allocation4], 1
    %1248 = vsyncpa %s1247, 1

</llo_original>
